<compile_context>
chip_gen: v7x
topology: tpu7x:2x2x1
jax: 0.10.0
libtpu: 0.0.40
codegen_flags: <defaults>
</compile_context>

<pallas_src>
import functools

import jax
import jax.numpy as jnp
from jax import lax
from jax.experimental import pallas as pl
from jax.experimental.pallas import tpu as pltpu


# --------------------------------------------------------------------------- #
# Kernels
# --------------------------------------------------------------------------- #
def _gather_fc1_kernel(ids_ref, emb_hbm, w_ref, b_ref, out_ref, xbuf, sem):
    """HBM row-gather + fused fc1 + ReLU for one token tile.

    ids_ref: SMEM int32 [N_pad]      scalar-prefetched token ids
    emb_hbm: ANY/HBM   [V, D]        embedding table (never copied wholesale)
    w_ref:   VMEM      [D, OUT_pad]  fc1 weight, pre-transposed
    b_ref:   VMEM      [1, OUT_pad]  fc1 bias
    out_ref: VMEM      [TILE_N, OUT_pad]
    xbuf:    VMEM      [TILE_N, D]   gathered embedding rows
    sem:     DMA semaphore
    """
    i = pl.program_id(0)
    tile_n = xbuf.shape[0]
    base = i * tile_n

    # Issue one row DMA per token of this tile (all in flight concurrently).
    @pl.loop(0, tile_n)
    def _issue(r):
        tok = ids_ref[base + r]
        pltpu.make_async_copy(
            emb_hbm.at[pl.ds(tok, 1), :],
            xbuf.at[pl.ds(r, 1), :],
            sem,
        ).start()

    # Wait for all row copies (each wait consumes one row-sized completion).
    @pl.loop(0, tile_n)
    def _wait_all(r):
        del r
        pltpu.make_async_copy(
            emb_hbm.at[pl.ds(0, 1), :],
            xbuf.at[pl.ds(0, 1), :],
            sem,
        ).wait()

    x = xbuf[...]                                                   # [TILE_N, D]
    y = jnp.dot(x, w_ref[...], preferred_element_type=jnp.float32)  # [TILE_N, OUT]
    y = y + b_ref[...].astype(jnp.float32)
    out_ref[...] = jnp.maximum(y, 0.0).astype(out_ref.dtype)


def _onehot_fc1_kernel(ids_ref, emb_ref, w_ref, b_ref, out_ref):
    """VMEM-pinned table: one-hot MXU lookup + fused fc1 + ReLU.

    ids_ref: VMEM int32 [TILE_N, 1]
    emb_ref: VMEM       [V_pad, D]      whole (padded) table, grid-invariant
    w_ref:   VMEM       [D, OUT_pad]
    b_ref:   VMEM       [1, OUT_pad]
    out_ref: VMEM       [TILE_N, OUT_pad]
    """
    tile_n = ids_ref.shape[0]
    v_pad = emb_ref.shape[0]

    ids = ids_ref[...]                                              # [TILE_N, 1]
    cols = lax.broadcasted_iota(jnp.int32, (tile_n, v_pad), 1)
    # One-hot built directly in the table dtype (bf16-friendly select).
    onehot = (ids == cols).astype(emb_ref.dtype)                    # [TILE_N, V_pad]
    x = jnp.dot(onehot, emb_ref[...], preferred_element_type=jnp.float32)
    # Lossless downcast: the accumulation is an exact copy of one table row.
    x = x.astype(w_ref.dtype)
    y = jnp.dot(x, w_ref[...], preferred_element_type=jnp.float32)
    y = y + b_ref[...].astype(jnp.float32)
    out_ref[...] = jnp.maximum(y, 0.0).astype(out_ref.dtype)


# --------------------------------------------------------------------------- #
# Wrapper
# --------------------------------------------------------------------------- #
def _round_up(x, m):
    return (x + m - 1) // m * m


@functools.partial(
    jax.jit,
    static_argnames=("tile_n", "param_dtype", "out_dtype",
                     "vmem_table_budget", "force_path"))
def sentence_embedding_forward(ids, mask, emb_table, fc1_weight, fc1_bias, *,
                               tile_n=256,
                               param_dtype=jnp.bfloat16,
                               out_dtype=jnp.float32,
                               vmem_table_budget=8 * 1024 * 1024,
                               force_path=None):
    """ids: [B, L] integer token ids; mask: unused (as in the PyTorch forward);
    emb_table: [V, D]; fc1_weight: [OUT, D] (PyTorch layout); fc1_bias: [OUT].
    Returns [B, L, OUT] in out_dtype (float32 by default, matching PyTorch)."""
    del mask  # forward() never uses mask

    B, L = ids.shape
    V, D = emb_table.shape
    OUT = fc1_weight.shape[0]

    emb_table = jnp.asarray(emb_table)
    fc1_weight = jnp.asarray(fc1_weight)
    fc1_bias = jnp.asarray(fc1_bias)
    if param_dtype is not None:
        emb_table = emb_table.astype(param_dtype)
        fc1_weight = fc1_weight.astype(param_dtype)
        fc1_bias = fc1_bias.astype(param_dtype)
    p_dtype = emb_table.dtype
    p_item = jnp.dtype(p_dtype).itemsize
    o_item = jnp.dtype(out_dtype).itemsize

    # Lane-dense output: pad OUT to a multiple of 128 (zero columns, sliced off).
    OUT_pad = _round_up(OUT, 128)
    w_t = fc1_weight.T                                   # [D, OUT]
    if OUT_pad != OUT:
        w_t = jnp.pad(w_t, ((0, 0), (0, OUT_pad - OUT)))
        fc1_bias = jnp.pad(fc1_bias, (0, OUT_pad - OUT))
    b2 = fc1_bias.reshape(1, OUT_pad)

    # Token tiling on grid axis 0 ("parallel" -> megacore sharding on v7x).
    N = B * L
    TILE_N = min(_round_up(tile_n, 8), _round_up(N, 8))
    N_pad = _round_up(N, TILE_N)
    grid_n = N_pad // TILE_N

    # Out-of-range ids are clamped to [0, V-1]; PyTorch nn.Embedding would
    # raise instead -- clamping keeps the HBM gather in-bounds.
    ids_flat = jnp.clip(ids.reshape(N).astype(jnp.int32), 0, V - 1)
    ids_flat = jnp.pad(ids_flat, (0, N_pad - N))

    table_bytes = V * D * p_item
    if force_path is None:
        use_small = table_bytes <= vmem_table_budget
    else:
        use_small = force_path == "small"

    if use_small:
        # ------------------- small-table, VMEM-pinned path ------------------ #
        V_pad = _round_up(V, 128)
        emb_p = emb_table
        if V_pad != V:
            emb_p = jnp.pad(emb_p, ((0, V_pad - V), (0, 0)))
        ids2 = ids_flat.reshape(N_pad, 1)

        flops = 2 * N_pad * V_pad * D + 2 * N_pad * D * OUT_pad
        bytes_accessed = (N_pad * 4 + V_pad * D * p_item + D * OUT_pad * p_item
                          + OUT_pad * p_item + N_pad * OUT_pad * o_item)
        vmem_need = (2 * V_pad * D * p_item            # pinned table (2 bufs)
                     + 2 * D * OUT_pad * p_item        # fc1 weight
                     + 2 * 8 * OUT_pad * p_item        # bias (sublane padded)
                     + 2 * TILE_N * OUT_pad * o_item   # output tile
                     + 2 * TILE_N * 128 * 4)           # ids tile
        vmem_limit = min(max(int(vmem_need * 1.5) + (4 << 20), 32 << 20), 64 << 20)

        out_flat = pl.pallas_call(
            _onehot_fc1_kernel,
            out_shape=jax.ShapeDtypeStruct((N_pad, OUT_pad), out_dtype),
            grid_spec=pltpu.PrefetchScalarGridSpec(
                num_scalar_prefetch=0,
                grid=(grid_n,),
                in_specs=[
                    pl.BlockSpec((TILE_N, 1), lambda i: (i, 0)),      # token ids
                    pl.BlockSpec((V_pad, D), lambda i: (0, 0)),       # table (pinned)
                    pl.BlockSpec((D, OUT_pad), lambda i: (0, 0)),     # fc1 weight^T
                    pl.BlockSpec((1, OUT_pad), lambda i: (0, 0)),     # fc1 bias
                ],
                out_specs=pl.BlockSpec((TILE_N, OUT_pad), lambda i: (i, 0)),
            ),
            compiler_params=pltpu.CompilerParams(
                dimension_semantics=("parallel",),
                vmem_limit_bytes=vmem_limit),
            cost_estimate=pl.CostEstimate(flops=flops, transcendentals=0,
                                          bytes_accessed=bytes_accessed),
        )(ids2, emb_p, w_t, b2)
    else:
        # --------------------- large-table, HBM-gather path ----------------- #
        flops = 2 * N_pad * D * OUT_pad
        bytes_accessed = (N_pad * 4 + N_pad * D * p_item + D * OUT_pad * p_item
                          + OUT_pad * p_item + N_pad * OUT_pad * o_item)
        vmem_need = (2 * D * OUT_pad * p_item                    # fc1 weight
                     + 2 * 8 * OUT_pad * p_item                  # bias
                     + 2 * TILE_N * OUT_pad * o_item             # output tile
                     + TILE_N * _round_up(D, 128) * p_item)      # gather buffer
        vmem_limit = min(max(int(vmem_need * 1.5) + (4 << 20), 32 << 20), 64 << 20)

        out_flat = pl.pallas_call(
            _gather_fc1_kernel,
            out_shape=jax.ShapeDtypeStruct((N_pad, OUT_pad), out_dtype),
            grid_spec=pltpu.PrefetchScalarGridSpec(
                num_scalar_prefetch=1,                            # token ids -> SMEM
                grid=(grid_n,),
                in_specs=[
                    pl.BlockSpec(memory_space=pl.ANY),            # emb table in HBM
                    pl.BlockSpec((D, OUT_pad), lambda i, ids: (0, 0)),   # fc1 W^T
                    pl.BlockSpec((1, OUT_pad), lambda i, ids: (0, 0)),   # fc1 bias
                ],
                out_specs=pl.BlockSpec((TILE_N, OUT_pad), lambda i, ids: (i, 0)),
                scratch_shapes=[
                    pltpu.VMEM((TILE_N, D), p_dtype),             # gathered rows
                    pltpu.SemaphoreType.DMA,                      # row-gather sem
                ],
            ),
            compiler_params=pltpu.CompilerParams(
                dimension_semantics=("parallel",),
                vmem_limit_bytes=vmem_limit),
            cost_estimate=pl.CostEstimate(flops=flops, transcendentals=0,
                                          bytes_accessed=bytes_accessed),
        )(ids_flat, emb_table, w_t, b2)

    return out_flat[:N, :OUT].reshape(B, L, OUT)


# --------------------------------------------------------------------------- #
# Self-test
# --------------------------------------------------------------------------- #
def _reference(ids, emb_table, fc1_weight, fc1_bias):
    x = jnp.take(emb_table, ids, axis=0)                    # [B, L, D]
    return jnp.maximum(x @ fc1_weight.T + fc1_bias, 0.0)    # [B, L, OUT]


if __name__ == "__main__":
    key = jax.random.PRNGKey(0)

    # --- Case 1: small-table (VMEM-pinned) path, f32 params, exactness -------
    B, L, V, D, OUT = 2, 8, 64, 32, 128
    k1, k2, k3, k4, key = jax.random.split(key, 5)
    ids = jax.random.randint(k1, (B, L), minval=0, maxval=V, dtype=jnp.int32)
    mask = jnp.ones((B, L), dtype=jnp.float32)   # unused by forward, kept for parity
    emb = jax.random.normal(k2, (V, D), dtype=jnp.float32) * 0.1
    w = jax.random.normal(k3, (OUT, D), dtype=jnp.float32) * 0.05
    b = jax.random.normal(k4, (OUT,), dtype=jnp.float32) * 0.05

    out1 = jax.block_until_ready(
        sentence_embedding_forward(ids, mask, emb, w, b, param_dtype=jnp.float32))
    ref1 = _reference(ids, emb, w, b)
    assert out1.shape == (B, L, OUT)
    assert jnp.allclose(out1, ref1, atol=1e-4, rtol=1e-4)

    # --- Case 2: forced HBM row-gather path, multi token tile, f32 params ----
    B2, L2, V2, D2, OUT2 = 4, 16, 80, 32, 256
    k1, k2, k3, k4, key = jax.random.split(key, 5)
    ids2 = jax.random.randint(k1, (B2, L2), minval=0, maxval=V2, dtype=jnp.int32)
    mask2 = jnp.ones((B2, L2), dtype=jnp.float32)
    emb2 = jax.random.normal(k2, (V2, D2), dtype=jnp.float32) * 0.1
    w2 = jax.random.normal(k3, (OUT2, D2), dtype=jnp.float32) * 0.05
    b2 = jax.random.normal(k4, (OUT2,), dtype=jnp.float32) * 0.05

    out2 = jax.block_until_ready(
        sentence_embedding_forward(ids2, mask2, emb2, w2, b2,
                                   tile_n=32, param_dtype=jnp.float32,
                                   force_path="gather"))
    ref2 = _reference(ids2, emb2, w2, b2)
    assert out2.shape == (B2, L2, OUT2)
    assert jnp.allclose(out2, ref2, atol=1e-4, rtol=1e-4)

    # --- Case 3: default bf16 params, small-table path ------------------------
    out3 = jax.block_until_ready(sentence_embedding_forward(ids, mask, emb, w, b))
    assert out3.shape == (B, L, OUT)
    assert jnp.allclose(out3, ref1, atol=2e-2, rtol=2e-2)

    # --- Case 4: default bf16 params, gather path ------------------------------
    out4 = jax.block_until_ready(
        sentence_embedding_forward(ids2, mask2, emb2, w2, b2,
                                   tile_n=32, force_path="gather"))
    assert out4.shape == (B2, L2, OUT2)
    assert jnp.allclose(out4, ref2, atol=2e-2, rtol=2e-2)

    print("KERNEL_OK")
</pallas_src>

<mosaic_0001>
module attributes {stable_mosaic.version = 11 : i64} {
  func.func @_onehot_fc1_kernel(%arg0: i32, %arg1: memref<16x1xi32, #tpu.memory_space<vmem>>, %arg2: memref<128x32xf32, #tpu.memory_space<vmem>>, %arg3: memref<32x128xf32, #tpu.memory_space<vmem>>, %arg4: memref<1x128xf32, #tpu.memory_space<vmem>>, %arg5: memref<16x128xf32, #tpu.memory_space<vmem>>) attributes {dimension_semantics = [#tpu.dimension_semantics<parallel>], iteration_bounds = array<i64: 1>, scalar_prefetch = 0 : i64, scratch_operands = 0 : i64, tpu.core_type = #tpu.core_type<tc>, window_params = [{transform_indices = @transform_0, window_bounds = array<i64: 16, 1>}, {pipeline_mode = #tpu.pipeline_mode<synchronous>, transform_indices = @transform_1, window_bounds = array<i64: 128, 32>}, {pipeline_mode = #tpu.pipeline_mode<synchronous>, transform_indices = @transform_2, window_bounds = array<i64: 32, 128>}, {pipeline_mode = #tpu.pipeline_mode<synchronous>, transform_indices = @transform_3, window_bounds = array<i64: 1, 128>}, {transform_indices = @transform_4, window_bounds = array<i64: 16, 128>}]} {
    %c0 = arith.constant 0 : index
    %c0_0 = arith.constant 0 : index
    %0 = vector.load %arg1[%c0, %c0_0] : memref<16x1xi32, #tpu.memory_space<vmem>>, vector<16x1xi32>
    %1 = tpu.iota {dimensions = array<i32: 1>} : vector<16x128xi32>
    %2 = vector.broadcast %0 : vector<16x1xi32> to vector<16x128xi32>
    %3 = arith.cmpi eq, %2, %1 : vector<16x128xi32>
    %4 = arith.extui %3 : vector<16x128xi1> to vector<16x128xi32>
    %5 = arith.sitofp %4 : vector<16x128xi32> to vector<16x128xf32>
    %c0_1 = arith.constant 0 : index
    %c0_2 = arith.constant 0 : index
    %6 = vector.load %arg2[%c0_1, %c0_2] : memref<128x32xf32, #tpu.memory_space<vmem>>, vector<128x32xf32>
    %cst = arith.constant dense<0.000000e+00> : vector<16x32xf32>
    %7 = tpu.matmul %5, %6, %cst {dimension_numbers = #tpu.dot_dimension_numbers<[1], [0], [0], [1], [0, 0, 1, 1], [], []>} : vector<16x128xf32>, vector<128x32xf32>, vector<16x32xf32> -> vector<16x32xf32>
    %c0_3 = arith.constant 0 : index
    %c0_4 = arith.constant 0 : index
    %8 = vector.load %arg3[%c0_3, %c0_4] : memref<32x128xf32, #tpu.memory_space<vmem>>, vector<32x128xf32>
    %cst_5 = arith.constant dense<0.000000e+00> : vector<16x128xf32>
    %9 = tpu.matmul %7, %8, %cst_5 {dimension_numbers = #tpu.dot_dimension_numbers<[1], [0], [0], [1], [0, 0, 1, 1], [], []>} : vector<16x32xf32>, vector<32x128xf32>, vector<16x128xf32> -> vector<16x128xf32>
    %c0_6 = arith.constant 0 : index
    %c0_7 = arith.constant 0 : index
    %10 = vector.load %arg4[%c0_6, %c0_7] : memref<1x128xf32, #tpu.memory_space<vmem>>, vector<1x128xf32>
    %11 = vector.broadcast %10 : vector<1x128xf32> to vector<16x128xf32>
    %12 = arith.addf %9, %11 : vector<16x128xf32>
    %cst_8 = arith.constant 0.000000e+00 : f32
    %13 = vector.broadcast %cst_8 : f32 to vector<16x128xf32>
    %14 = arith.maximumf %12, %13 : vector<16x128xf32>
    %c0_9 = arith.constant 0 : index
    %c0_10 = arith.constant 0 : index
    %15 = vector.load %arg5[%c0_9, %c0_10] : memref<16x128xf32, #tpu.memory_space<vmem>>, vector<16x128xf32>
    tpu.vector_store %arg5[%c0_9, %c0_10], %14 {strides = array<i32>} : memref<16x128xf32, #tpu.memory_space<vmem>>, vector<16x128xf32>,
    return
  }
  func.func @transform_0(%arg0: i32) -> (i32, i32) {
    %c0_i32 = arith.constant 0 : i32
    %c0_i32_0 = arith.constant 0 : i32
    return %arg0, %c0_i32 : i32, i32
  }
  func.func @transform_1(%arg0: i32) -> (i32, i32) {
    %c0_i32 = arith.constant 0 : i32
    %c0_i32_0 = arith.constant 0 : i32
    %c0_i32_1 = arith.constant 0 : i32
    return %c0_i32, %c0_i32_0 : i32, i32
  }
  func.func @transform_2(%arg0: i32) -> (i32, i32) {
    %c0_i32 = arith.constant 0 : i32
    %c0_i32_0 = arith.constant 0 : i32
    %c0_i32_1 = arith.constant 0 : i32
    return %c0_i32, %c0_i32_0 : i32, i32
  }
  func.func @transform_3(%arg0: i32) -> (i32, i32) {
    %c0_i32 = arith.constant 0 : i32
    %c0_i32_0 = arith.constant 0 : i32
    %c0_i32_1 = arith.constant 0 : i32
    return %c0_i32, %c0_i32_0 : i32, i32
  }
  func.func @transform_4(%arg0: i32) -> (i32, i32) {
    %c0_i32 = arith.constant 0 : i32
    %c0_i32_0 = arith.constant 0 : i32
    return %arg0, %c0_i32 : i32, i32
  }
}

</mosaic_0001>

<llo_original>
// kernel: sentence_embedding_forward.1
$region0: #{sentence_embedding_forward.1}
  #allocation0 [shape = 'u32[]', space=smem, size = 0x4, offset = 0x4, fixed_abs, tag = 'smem constant byte address 0x4 - core index']
  #allocation1 [shape = 'u32[144,128]{1,0:T(1,128)}', space=vmem, size = 0x12000, scoped, tag = 'internal scratch']
  %s0 = inlined_call_operand.vmem [shape: s32[16,1], index: 0, kind: input, shape index: {}]
  %s1 = inlined_call_operand.vmem [shape: f32[128,32], index: 1, kind: input, shape index: {}]
  %s2 = inlined_call_operand.vmem [shape: f32[32,128], index: 2, kind: input, shape index: {}]
  %s3 = inlined_call_operand.vmem [shape: f32[1,128], index: 3, kind: input, shape index: {}]
  %s4 = inlined_call_operand.hbm [shape: f32[16,128], index: 4, kind: output, shape index: {}]
  %s5 = sld [smem:[#allocation0]]
  $region26: #{sentence_embedding_forward.1} parent=0
    _
  %s7 = ssub.s32 1, %s5
  %s8 = scalar_select 0, %s7, %s5
  $region1: #{sentence_embedding_forward.1} parent=0
    #allocation2 [shape = 'u8[8192]{0}', space=vmem, size = 0x2000, scoped, tag = 'output window, operand 0, single buffered']
    #allocation3 [shape = 's32[1]{0}', space=sflag, size = 0x4, scoped, tag = 'scoped memory for sentence_embedding_forward.1']
    %9 = vsyncpa [#allocation3], 0
    // Predicated region
    $region2: #{sentence_embedding_forward.1} parent=1 // pred_check
      _
    $region3: #{sentence_embedding_forward.1} parent=1 // pred_check_branch
      %11 = sbr.rel (0) target = $region5
    $region4: #{sentence_embedding_forward.1} parent=1 // pred_region
      _
    $region5: #{sentence_embedding_forward.1} parent=1 // pred_fallthru
      _
    // Predicated region
    $region6: #{sentence_embedding_forward.1} parent=1 // pred_check
      _
    $region7: #{sentence_embedding_forward.1} parent=1 // pred_check_branch
      %13 = sbr.rel (0) target = $region9
    $region8: #{sentence_embedding_forward.1} parent=1 // pred_region
      _
    $region9: #{sentence_embedding_forward.1} parent=1 // pred_fallthru
      _
    // Predicated region
    $region10: #{sentence_embedding_forward.1} parent=1 // pred_check
      _
    $region11: #{sentence_embedding_forward.1} parent=1 // pred_check_branch
      %15 = sbr.rel (0) target = $region13
    $region12: #{sentence_embedding_forward.1} parent=1 // pred_region
      _
    $region13: #{sentence_embedding_forward.1} parent=1 // pred_fallthru
      _
    // Predicated region
    $region14: #{sentence_embedding_forward.1} parent=1 // pred_check
      _
    $region15: #{sentence_embedding_forward.1} parent=1 // pred_check_branch
      %17 = sbr.rel (0) target = $region17
    $region16: #{sentence_embedding_forward.1} parent=1 // pred_region
      _
    $region17: #{sentence_embedding_forward.1} parent=1 // pred_fallthru
      _
    %v18 = vld [vmem:[%s0] sm:$0xff]
    %v19 = vld [vmem:[%s0 + $0x8] sm:$0xff]
    %v20 = vlaneseq
    %v21 = vand.u32 %v20, 127
    %22 = vset.pattern.permute.xlu0 0
    %23 = vperm.xlu0 %22, %v18
    %v24 = vpop.permute.xlu0 %23
    %25 = vset.pattern.permute.xlu0 0
    %26 = vperm.xlu0 %25, %v19
    %v27 = vpop.permute.xlu0 %26
    %vm28 = vcmp.eq.s32.totalorder %v24, %v21
    %vm29 = vcmp.eq.s32.totalorder %v27, %v21
    %v30 = vsel %vm28, 1, 0
    %v31 = vsel %vm29, 1, 0
    %v32 = vcvt.s32.f32 %v30
    %v33 = vcvt.s32.f32 %v31
    %v34 = vld [vmem:[%s1] sm:$0xff]
    %v35 = vld [vmem:[%s1 + $0x8] sm:$0xff]
    %v36 = vld [vmem:[%s1 + $0x10] sm:$0xff]
    %v37 = vld [vmem:[%s1 + $0x18] sm:$0xff]
    %v38 = vld [vmem:[%s1 + $0x20] sm:$0xff]
    %v39 = vld [vmem:[%s1 + $0x28] sm:$0xff]
    %v40 = vld [vmem:[%s1 + $0x30] sm:$0xff]
    %v41 = vld [vmem:[%s1 + $0x38] sm:$0xff]
    %v42 = vld [vmem:[%s1 + $0x40] sm:$0xff]
    %v43 = vld [vmem:[%s1 + $0x48] sm:$0xff]
    %v44 = vld [vmem:[%s1 + $0x50] sm:$0xff]
    %v45 = vld [vmem:[%s1 + $0x58] sm:$0xff]
    %v46 = vld [vmem:[%s1 + $0x60] sm:$0xff]
    %v47 = vld [vmem:[%s1 + $0x68] sm:$0xff]
    %v48 = vld [vmem:[%s1 + $0x70] sm:$0xff]
    %v49 = vld [vmem:[%s1 + $0x78] sm:$0xff]
    %50 = vmatprep.subr.mxu0 0.0
    %51 = vmatpush1.msra.mxu0 %v34
    %52 = vmatprep.subr.mxu0 0.0
    %53 = vmatpush1.msra.mxu0 %v35
    %54 = vmatprep.subr.mxu0 0.0
    %55 = vmatpush1.msra.mxu0 %v36
    %56 = vmatprep.subr.mxu0 0.0
    %57 = vmatpush1.msra.mxu0 %v37
    %58 = vmatprep.subr.mxu0 0.0
    %59 = vmatpush1.msra.mxu0 %v38
    %60 = vmatprep.subr.mxu0 0.0
    %61 = vmatpush1.msra.mxu0 %v39
    %62 = vmatprep.subr.mxu0 0.0
    %63 = vmatpush1.msra.mxu0 %v40
    %64 = vmatprep.subr.mxu0 0.0
    %65 = vmatpush1.msra.mxu0 %v41
    %66 = vmatprep.subr.mxu0 0.0
    %67 = vmatpush1.msra.mxu0 %v42
    %68 = vmatprep.subr.mxu0 0.0
    %69 = vmatpush1.msra.mxu0 %v43
    %70 = vmatprep.subr.mxu0 0.0
    %71 = vmatpush1.msra.mxu0 %v44
    %72 = vmatprep.subr.mxu0 0.0
    %73 = vmatpush1.msra.mxu0 %v45
    %74 = vmatprep.subr.mxu0 0.0
    %75 = vmatpush1.msra.mxu0 %v46
    %76 = vmatprep.subr.mxu0 0.0
    %77 = vmatpush1.msra.mxu0 %v47
    %78 = vmatprep.subr.mxu0 0.0
    %79 = vmatpush1.msra.mxu0 %v48
    %80 = vmatprep.subr.mxu0 0.0
    %81 = vmatpush1.msra.mxu0 %v49
    %82 = vmatprep.subr.mxu0 0.0
    %83 = vmatpush1.msra.mxu0 0.0
    %84 = vmatprep.subr.mxu0 0.0
    %85 = vmatpush1.msra.mxu0 0.0
    %86 = vmatprep.subr.mxu0 0.0
    %87 = vmatpush1.msra.mxu0 0.0
    %88 = vmatprep.subr.mxu0 0.0
    %89 = vmatpush1.msra.mxu0 0.0
    %90 = vmatprep.subr.mxu0 0.0
    %91 = vmatpush1.msra.mxu0 0.0
    %92 = vmatprep.subr.mxu0 0.0
    %93 = vmatpush1.msra.mxu0 0.0
    %94 = vmatprep.subr.mxu0 0.0
    %95 = vmatpush1.msra.mxu0 0.0
    %96 = vmatprep.subr.mxu0 0.0
    %97 = vmatpush1.msra.mxu0 0.0
    %98 = vmatprep.subr.mxu0 0.0
    %99 = vmatpush1.msra.mxu0 0.0
    %100 = vmatprep.subr.mxu0 0.0
    %101 = vmatpush1.msra.mxu0 0.0
    %102 = vmatprep.subr.mxu0 0.0
    %103 = vmatpush1.msra.mxu0 0.0
    %104 = vmatprep.subr.mxu0 0.0
    %105 = vmatpush1.msra.mxu0 0.0
    %106 = vmatprep.subr.mxu0 0.0
    %107 = vmatpush1.msra.mxu0 0.0
    %108 = vmatprep.subr.mxu0 0.0
    %109 = vmatpush1.msra.mxu0 0.0
    %110 = vmatprep.subr.mxu0 0.0
    %111 = vmatpush1.msra.mxu0 0.0
    %112 = vmatprep.subr.mxu0 0.0
    %113 = vmatpush1.msra.mxu0 0.0
    %114 = vmatprep.mubr.f32.mxu0 0.0
    %115 = vmatmul.mubr.f32.gmra.mrb[0].mxu0 %v32
    %v116 = vpop.f32.mrb[0].mxu0
    %v117 = vadd.f32 0.0, %v116
    %v118 = vpop.f32.mrb[0].mxu0
    %119 = vmatprep.mubr.f32.mxu0 0.0
    %120 = vmatmul.mubr.f32.gmra.mrb[0].mxu0 %v33
    %v121 = vpop.f32.mrb[0].mxu0
    %v122 = vadd.f32 0.0, %v121
    %v123 = vpop.f32.mrb[0].mxu0
    %124 = vdwg.mxu0
    %v125 = vld [vmem:[%s2] sm:$0xff]
    %v126 = vld [vmem:[%s2 + $0x8] sm:$0xff]
    %v127 = vld [vmem:[%s2 + $0x10] sm:$0xff]
    %v128 = vld [vmem:[%s2 + $0x18] sm:$0xff]
    %v129 = vld [vmem:[%s3] sm:$0x1]
    %v131 = vlaneseq
    %v132 = vshrl.u32 %v131, 7
    %v133 = vsub.s32 0, %v132
    %v134 = vrot.slane %v129, %v133
    %vm136 = vcmask 261120
    %v138 = vsel %vm136, %v117, 0
    %v141 = vsel %vm136, %v122, 0
    %143 = vmatprep.subr.mxu0 0.0
    %144 = vmatpush1.msra.mxu0 %v125
    %145 = vmatprep.subr.mxu0 0.0
    %146 = vmatpush1.msra.mxu0 %v126
    %147 = vmatprep.subr.mxu0 0.0
    %148 = vmatpush1.msra.mxu0 %v127
    %149 = vmatprep.subr.mxu0 0.0
    %150 = vmatpush1.msra.mxu0 %v128
    %151 = vmatprep.subr.mxu0 0.0
    %152 = vmatpush1.msra.mxu0 0.0
    %153 = vmatprep.subr.mxu0 0.0
    %154 = vmatpush1.msra.mxu0 0.0
    %155 = vmatprep.subr.mxu0 0.0
    %156 = vmatpush1.msra.mxu0 0.0
    %157 = vmatprep.subr.mxu0 0.0
    %158 = vmatpush1.msra.mxu0 0.0
    %159 = vmatprep.subr.mxu0 0.0
    %160 = vmatpush1.msra.mxu0 0.0
    %161 = vmatprep.subr.mxu0 0.0
    %162 = vmatpush1.msra.mxu0 0.0
    %163 = vmatprep.subr.mxu0 0.0
    %164 = vmatpush1.msra.mxu0 0.0
    %165 = vmatprep.subr.mxu0 0.0
    %166 = vmatpush1.msra.mxu0 0.0
    %167 = vmatprep.subr.mxu0 0.0
    %168 = vmatpush1.msra.mxu0 0.0
    %169 = vmatprep.subr.mxu0 0.0
    %170 = vmatpush1.msra.mxu0 0.0
    %171 = vmatprep.subr.mxu0 0.0
    %172 = vmatpush1.msra.mxu0 0.0
    %173 = vmatprep.subr.mxu0 0.0
    %174 = vmatpush1.msra.mxu0 0.0
    %175 = vmatprep.subr.mxu0 0.0
    %176 = vmatpush1.msra.mxu0 0.0
    %177 = vmatprep.subr.mxu0 0.0
    %178 = vmatpush1.msra.mxu0 0.0
    %179 = vmatprep.subr.mxu0 0.0
    %180 = vmatpush1.msra.mxu0 0.0
    %181 = vmatprep.subr.mxu0 0.0
    %182 = vmatpush1.msra.mxu0 0.0
    %183 = vmatprep.subr.mxu0 0.0
    %184 = vmatpush1.msra.mxu0 0.0
    %185 = vmatprep.subr.mxu0 0.0
    %186 = vmatpush1.msra.mxu0 0.0
    %187 = vmatprep.subr.mxu0 0.0
    %188 = vmatpush1.msra.mxu0 0.0
    %189 = vmatprep.subr.mxu0 0.0
    %190 = vmatpush1.msra.mxu0 0.0
    %191 = vmatprep.subr.mxu0 0.0
    %192 = vmatpush1.msra.mxu0 0.0
    %193 = vmatprep.subr.mxu0 0.0
    %194 = vmatpush1.msra.mxu0 0.0
    %195 = vmatprep.subr.mxu0 0.0
    %196 = vmatpush1.msra.mxu0 0.0
    %197 = vmatprep.subr.mxu0 0.0
    %198 = vmatpush1.msra.mxu0 0.0
    %199 = vmatprep.subr.mxu0 0.0
    %200 = vmatpush1.msra.mxu0 0.0
    %201 = vmatprep.subr.mxu0 0.0
    %202 = vmatpush1.msra.mxu0 0.0
    %203 = vmatprep.subr.mxu0 0.0
    %204 = vmatpush1.msra.mxu0 0.0
    %205 = vmatprep.subr.mxu0 0.0
    %206 = vmatpush1.msra.mxu0 0.0
    %207 = vmatprep.mubr.f32.mxu0 0.0
    %208 = vmatmul.mubr.f32.gmra.mrb[0].mxu0 %v138
    %v209 = vpop.f32.mrb[0].mxu0
    %v210 = vadd.f32 %v134, %v209
    %v211 = vpop.f32.mrb[0].mxu0
    %212 = vmatprep.mubr.f32.mxu0 0.0
    %213 = vmatmul.mubr.f32.gmra.mrb[0].mxu0 %v141
    %v214 = vpop.f32.mrb[0].mxu0
    %v215 = vadd.f32 %v134, %v214
    %v216 = vpop.f32.mrb[0].mxu0
    %217 = vdwg.mxu0
    %v218 = vmax.f32 %v210, 0.0
    %v219 = vmax.f32 %v215, 0.0
    %220 = vst [vmem:[#allocation2] sm:$0xff] %v218
    %221 = vst [vmem:[#allocation2 + $0x8] sm:$0xff] %v219
    // Predicated region
    $region18: #{sentence_embedding_forward.1} parent=1 // pred_check
      _
    $region19: #{sentence_embedding_forward.1} parent=1 // pred_check_branch
      %223 = sbr.rel (0) target = $region21
    $region20: #{sentence_embedding_forward.1} parent=1 // pred_region
      %s225 = ssub.s32 256, 256
      %226 = vsyncadd [#allocation3], %s225
      %s227 = sshll.u32 [#allocation2], 4
      %s228 = int_to_ptr.vmem [resolvable:$true] %s227
      %233 = dma.vmem_to_hbm [thread:$0]  %s228, 256, %s4, [#allocation3], 128, 128, 8
    $region21: #{sentence_embedding_forward.1} parent=1 // pred_fallthru
      _
    // Predicated region
    $region22: #{sentence_embedding_forward.1} parent=1 // pred_check
      _
    $region23: #{sentence_embedding_forward.1} parent=1 // pred_check_branch
      %235 = sbr.rel (0) target = $region25
    $region24: #{sentence_embedding_forward.1} parent=1 // pred_region
      %236 = dma.done [#allocation3], 256
    $region25: #{sentence_embedding_forward.1} parent=1 // pred_fallthru
      _
    %237 = vsyncpa [#allocation3], 1

</llo_original>
